<compile_context>
chip_gen: v5e
topology: v5e:2x2
jax: 0.10.0
libtpu: 0.0.40
codegen_flags: <defaults>
</compile_context>

<pallas_src>
import jax
import jax.numpy as jnp
from jax import lax
from jax.experimental import pallas as pl
from jax.experimental.pallas import tpu as pltpu


def _round_up(x, m):
    return ((x + m - 1) // m) * m


def _make_kernel(tile_rows, lane, rows, mask_last, unroll):
    """Per-block partial-sum kernel: part[8, lane] = sum of (x-t)^2 over the block."""
    groups = tile_rows // 8

    def kernel(x_ref, t_ref, part_ref):
        row0 = pl.program_id(0) * tile_rows  # first element-row of this block

        def body(g, acc):
            start = pl.multiple_of(g * 8, 8)
            x = x_ref[pl.ds(start, 8), :].astype(jnp.float32)
            t = t_ref[pl.ds(start, 8), :].astype(jnp.float32)
            d = x - t
            sq = d * d
            if mask_last:
                # Rows >= `rows` belong to the (garbage-filled) partial edge
                # block; zero them before accumulating.  Pure VPU work, fully
                # hidden under the input DMA.
                ridx = row0 + g * 8 + lax.broadcasted_iota(jnp.int32, (8, lane), 0)
                sq = jnp.where(ridx < rows, sq, 0.0)
            return acc + sq

        part_ref[...] = lax.fori_loop(
            0, groups, body, jnp.zeros((8, lane), jnp.float32), unroll=unroll
        )

    return kernel


def content_loss_forward(x, target):
    """Pallas implementation of ContentLoss.forward.

    Returns:
      (y, loss): y is the input unchanged (identity, no kernel copy),
                 loss == mean((x - target)**2) as an f32 scalar.
    """
    assert x.shape == target.shape, "input/target shape mismatch"
    total = int(x.size)
    if total == 0:
        return x, jnp.float32(0.0)
    itemsize = max(jnp.dtype(x.dtype).itemsize, jnp.dtype(target.dtype).itemsize)

    xf = x.reshape(-1)
    tf = target.reshape(-1)

    # Lane width: largest 128-multiple that divides the element count so the
    # flattening reshape is free (no host-side pad/copy of the inputs).
    # Prefer a choice that also yields >= 8 rows.
    lane = None
    for cand in (512, 256, 128):
        if total % cand == 0 and total // cand >= 8:
            lane = cand
            break
    if lane is None:
        for cand in (512, 256, 128):
            if total % cand == 0:
                lane = cand
                break
    if lane is None:
        # TODO(synk): ragged fallback (element count not a multiple of 128)
        # still copies both inputs once via jnp.pad; never hit by real VGG
        # feature maps, only odd debug shapes.
        lane = 128
        padded = _round_up(total, 8 * lane)
        xf = jnp.pad(xf, (0, padded - total))
        tf = jnp.pad(tf, (0, padded - total))
        rows = padded // lane
    else:
        rows = total // lane

    x2 = xf.reshape(rows, lane)
    t2 = tf.reshape(rows, lane)
    if rows < 8:
        # Tiny input (< 8*lane elements): pad the handful of rows to one
        # 8-row tile.  Negligible; zero rows contribute nothing to the sum.
        x2 = jnp.pad(x2, ((0, 8 - rows), (0, 0)))
        t2 = jnp.pad(t2, ((0, 8 - rows), (0, 0)))
        rows = 8

    # Block sizing: target ~4 MiB per input per block (amortizes per-step
    # overhead; biggest win on v7x), while producing an even, balanced number
    # of blocks >= 2 whenever possible so the "parallel" axis uses both TCs.
    max_tile_rows = max(8, ((4 * 1024 * 1024) // (lane * itemsize)) // 8 * 8)
    pairs = max(1, -(-rows // (2 * max_tile_rows)))                 # ceil
    tile_rows = min(max_tile_rows, _round_up(-(-rows // (2 * pairs)), 8))
    tile_rows = min(tile_rows, _round_up(rows, 8))
    num_blocks = pl.cdiv(rows, tile_rows)
    mask_last = (rows % tile_rows) != 0

    groups = tile_rows // 8
    kernel = _make_kernel(tile_rows, lane, rows, mask_last, unroll=min(4, groups))

    partials = pl.pallas_call(
        kernel,
        out_shape=jax.ShapeDtypeStruct((num_blocks, 8, lane), jnp.float32),
        grid_spec=pltpu.PrefetchScalarGridSpec(
            num_scalar_prefetch=0,
            grid=(num_blocks,),
            in_specs=[
                pl.BlockSpec((tile_rows, lane), lambda i: (i, 0)),
                pl.BlockSpec((tile_rows, lane), lambda i: (i, 0)),
            ],
            # One lane-dense (8, lane) partial-sum tile per grid step; leading
            # axis squeezed inside the kernel.
            out_specs=pl.BlockSpec((None, 8, lane), lambda i: (i, 0, 0)),
        ),
        compiler_params=pltpu.CompilerParams(
            # Blocks are independent -> parallel grid (both TCs on v7x).
            dimension_semantics=("parallel",),
            # 2 inputs x 2 pipeline buffers x ~4 MiB blocks (+ tiny output);
            # 32 MiB is safe on v5e/v6e/v7x and clears v5e's 16 MiB default.
            vmem_limit_bytes=32 * 1024 * 1024,
        ),
        cost_estimate=pl.CostEstimate(
            flops=3 * rows * lane,
            transcendentals=0,
            bytes_accessed=2 * rows * lane * itemsize + num_blocks * 8 * lane * 4,
        ),
    )(x2, t2)

    loss = jnp.sum(partials) / jnp.float32(total)
    # ContentLoss.forward returns its input unchanged (no copy needed).
    return x, loss


if __name__ == "__main__":
    key = jax.random.PRNGKey(0)
    kx, kt, kx2, kt2, kx3, kt3 = jax.random.split(key, 6)

    # Small feature-map-like shape consistent with the module (NCHW).
    x = jax.random.normal(kx, (2, 4, 16, 16), dtype=jnp.float32)
    target = jax.random.normal(kt, (2, 4, 16, 16), dtype=jnp.float32)
    y, loss = content_loss_forward(x, target)
    jax.block_until_ready((y, loss))
    ref_loss = jnp.mean((x - target) ** 2)
    assert jnp.allclose(loss, ref_loss, rtol=1e-6, atol=1e-6), (loss, ref_loss)
    assert jnp.array_equal(y, x), "forward must return input unchanged"

    # Shape that exercises the in-kernel masked partial last block + 2 blocks.
    xm = jax.random.normal(kx3, (1, 3, 40, 128), dtype=jnp.float32)
    tm = jax.random.normal(kt3, (1, 3, 40, 128), dtype=jnp.float32)
    ym, loss_m = content_loss_forward(xm, tm)
    jax.block_until_ready((ym, loss_m))
    ref_m = jnp.mean((xm - tm) ** 2)
    assert jnp.allclose(loss_m, ref_m, rtol=1e-6, atol=1e-6), (loss_m, ref_m)
    assert jnp.array_equal(ym, xm)

    # Ragged shape (exercises the small zero-pad fallback path).
    xr = jax.random.normal(kx2, (2, 3, 7, 5), dtype=jnp.float32)
    tr = jax.random.normal(kt2, (2, 3, 7, 5), dtype=jnp.float32)
    yr, loss_r = content_loss_forward(xr, tr)
    jax.block_until_ready((yr, loss_r))
    ref_r = jnp.mean((xr - tr) ** 2)
    assert jnp.allclose(loss_r, ref_r, rtol=1e-6, atol=1e-6), (loss_r, ref_r)
    assert jnp.array_equal(yr, xr)

    print("KERNEL_OK")
</pallas_src>

<mosaic_0001>
module attributes {stable_mosaic.version = 11 : i64} {
  func.func @kernel(%arg0: i32, %arg1: memref<8x256xf32, #tpu.memory_space<vmem>>, %arg2: memref<8x256xf32, #tpu.memory_space<vmem>>, %arg3: memref<1x8x256xf32, #tpu.memory_space<vmem>>) attributes {dimension_semantics = [#tpu.dimension_semantics<parallel>], iteration_bounds = array<i64: 1>, scalar_prefetch = 0 : i64, scratch_operands = 0 : i64, tpu.core_type = #tpu.core_type<tc>, window_params = [{transform_indices = @transform_0, window_bounds = array<i64: 8, 256>}, {transform_indices = @transform_1, window_bounds = array<i64: 8, 256>}, {transform_indices = @transform_2, window_bounds = array<i64: 1, 8, 256>}]} {
    %cst = arith.constant 0.000000e+00 : f32
    %0 = vector.broadcast %cst : f32 to vector<8x256xf32>
    %c0_i32 = arith.constant 0 : i32
    %c8_i32 = arith.constant 8 : i32
    %1 = arith.muli %c0_i32, %c8_i32 : i32
    %2 = tpu.assume_multiple %1, 8 : i32
    %3 = arith.index_cast %2 : i32 to index
    %c0 = arith.constant 0 : index
    %4 = vector.load %arg1[%3, %c0] : memref<8x256xf32, #tpu.memory_space<vmem>>, vector<8x256xf32>
    %5 = arith.index_cast %2 : i32 to index
    %c0_0 = arith.constant 0 : index
    %6 = vector.load %arg2[%5, %c0_0] : memref<8x256xf32, #tpu.memory_space<vmem>>, vector<8x256xf32>
    %7 = arith.subf %4, %6 : vector<8x256xf32>
    %8 = arith.mulf %7, %7 : vector<8x256xf32>
    %9 = arith.addf %0, %8 : vector<8x256xf32>
    %c1_i32 = arith.constant 1 : i32
    %c0_1 = arith.constant 0 : index
    %c0_2 = arith.constant 0 : index
    %c0_3 = arith.constant 0 : index
    %10 = vector.load %arg3[%c0_1, %c0_2, %c0_3] : memref<1x8x256xf32, #tpu.memory_space<vmem>>, vector<1x8x256xf32>
    %11 = vector.shape_cast %10 : vector<1x8x256xf32> to vector<8x256xf32>
    %12 = vector.shape_cast %9 : vector<8x256xf32> to vector<1x8x256xf32>
    tpu.vector_store %arg3[%c0_1, %c0_2, %c0_3], %12 {strides = array<i32>} : memref<1x8x256xf32, #tpu.memory_space<vmem>>, vector<1x8x256xf32>,
    return
  }
  func.func @transform_0(%arg0: i32) -> (i32, i32) {
    %c0_i32 = arith.constant 0 : i32
    %c0_i32_0 = arith.constant 0 : i32
    return %arg0, %c0_i32 : i32, i32
  }
  func.func @transform_1(%arg0: i32) -> (i32, i32) {
    %c0_i32 = arith.constant 0 : i32
    %c0_i32_0 = arith.constant 0 : i32
    return %arg0, %c0_i32 : i32, i32
  }
  func.func @transform_2(%arg0: i32) -> (i32, i32, i32) {
    %c0_i32 = arith.constant 0 : i32
    %c0_i32_0 = arith.constant 0 : i32
    %c0_i32_1 = arith.constant 0 : i32
    return %arg0, %c0_i32, %c0_i32_0 : i32, i32, i32
  }
}

</mosaic_0001>

<llo_original>
// kernel: tpu_custom_call.1
$region0: #{tpu_custom_call.1}
  #allocation0 [shape = 'u32[]', space=smem, size = 0x4, offset = 0x4, fixed_abs, tag = 'smem constant byte address 0x4 - core index']
  #allocation1 [shape = 'u32[72,128]{1,0:T(1,128)}', space=vmem, size = 0x9000, scoped, tag = 'internal scratch']
  %s0 = inlined_call_operand.hbm [shape: f32[8,256], index: 0, kind: input, shape index: {}]
  %s1 = inlined_call_operand.hbm [shape: f32[8,256], index: 1, kind: input, shape index: {}]
  %s2 = inlined_call_operand.hbm [shape: f32[1,8,256], index: 2, kind: output, shape index: {}]
  %s3 = sld [smem:[#allocation0]]
  $region26: #{tpu_custom_call.1} parent=0
    _
  %s5 = ssub.s32 1, %s3
  %s6 = scalar_select 0, %s5, %s3
  $region1: #{tpu_custom_call.1} parent=0
    #allocation2 [shape = 'u8[8192]{0}', space=vmem, size = 0x2000, scoped, tag = 'input window, operand 0, single buffered']
    #allocation3 [shape = 's32[1]{0}', space=sflag, size = 0x4, scoped, tag = 'scoped memory for tpu_custom_call.1']
    #allocation4 [shape = 's32[1]{0}', space=sflag, size = 0x4, scoped, tag = 'scoped memory for tpu_custom_call.1']
    #allocation5 [shape = 'u8[8192]{0}', space=vmem, size = 0x2000, scoped, tag = 'input window, operand 1, single buffered']
    #allocation6 [shape = 's32[1]{0}', space=sflag, size = 0x4, scoped, tag = 'scoped memory for tpu_custom_call.1']
    #allocation7 [shape = 'u8[8192]{0}', space=vmem, size = 0x2000, scoped, tag = 'output window, operand 0, single buffered']
    %7 = vsyncpa [#allocation3], 0
    %8 = vsyncpa [#allocation6], 0
    %9 = vsyncpa [#allocation4], 0
    // Predicated region
    $region2: #{tpu_custom_call.1} parent=1 // pred_check
      _
    $region3: #{tpu_custom_call.1} parent=1 // pred_check_branch
      %11 = sbr.rel (0) target = $region5
    $region4: #{tpu_custom_call.1} parent=1 // pred_region
      %13 = vsyncadd [#allocation3], 0
      %s15 = sshll.u32 %s0, 4
      %s16 = int_to_ptr.hbm [resolvable:$true] %s15
      %s17 = sshll.u32 [#allocation2], 4
      %s18 = int_to_ptr.vmem [resolvable:$true] %s17
      %20 = dma.hbm_to_vmem [thread:$0]  %s16, 256, %s18, [#allocation3]
    $region5: #{tpu_custom_call.1} parent=1 // pred_fallthru
      _
    // Predicated region
    $region6: #{tpu_custom_call.1} parent=1 // pred_check
      _
    $region7: #{tpu_custom_call.1} parent=1 // pred_check_branch
      %22 = sbr.rel (0) target = $region9
    $region8: #{tpu_custom_call.1} parent=1 // pred_region
      %24 = vsyncadd [#allocation6], 0
      %s26 = sshll.u32 %s1, 4
      %s27 = int_to_ptr.hbm [resolvable:$true] %s26
      %s28 = sshll.u32 [#allocation5], 4
      %s29 = int_to_ptr.vmem [resolvable:$true] %s28
      %31 = dma.hbm_to_vmem [thread:$0]  %s27, 256, %s29, [#allocation6]
    $region9: #{tpu_custom_call.1} parent=1 // pred_fallthru
      _
    // Predicated region
    $region10: #{tpu_custom_call.1} parent=1 // pred_check
      _
    $region11: #{tpu_custom_call.1} parent=1 // pred_check_branch
      %33 = sbr.rel (0) target = $region13
    $region12: #{tpu_custom_call.1} parent=1 // pred_region
      %35 = dma.done [#allocation3], 256
    $region13: #{tpu_custom_call.1} parent=1 // pred_fallthru
      _
    // Predicated region
    $region14: #{tpu_custom_call.1} parent=1 // pred_check
      _
    $region15: #{tpu_custom_call.1} parent=1 // pred_check_branch
      %37 = sbr.rel (0) target = $region17
    $region16: #{tpu_custom_call.1} parent=1 // pred_region
      %39 = dma.done [#allocation6], 256
    $region17: #{tpu_custom_call.1} parent=1 // pred_fallthru
      _
    %s40 = smul.u32 0, 2
    %s41 = smul.addr %s40, 8
    %s42 = scalar_lea.vmem [#allocation2], %s41
    %v43 = vld [vmem:[%s42] sm:$0xff]
    %v44 = vld [vmem:[%s42 + $0x8] sm:$0xff]
    %s45 = smul.addr %s40, 8
    %s46 = scalar_lea.vmem [#allocation5], %s45
    %v47 = vld [vmem:[%s46] sm:$0xff]
    %v48 = vld [vmem:[%s46 + $0x8] sm:$0xff]
    %v49 = vsub.f32 %v43, %v47
    %v50 = vsub.f32 %v44, %v48
    %v51 = vmul.f32 %v49, %v49
    %v52 = vmul.f32 %v50, %v50
    %v53 = vadd.f32 %v51, 0.0
    %v54 = vadd.f32 %v52, 0.0
    %55 = vst [vmem:[#allocation7] sm:$0xff] %v53
    %56 = vst [vmem:[#allocation7 + $0x8] sm:$0xff] %v54
    // Predicated region
    $region18: #{tpu_custom_call.1} parent=1 // pred_check
      _
    $region19: #{tpu_custom_call.1} parent=1 // pred_check_branch
      %58 = sbr.rel (0) target = $region21
    $region20: #{tpu_custom_call.1} parent=1 // pred_region
      %60 = vsyncadd [#allocation4], 0
      %s62 = sshll.u32 [#allocation7], 4
      %s63 = int_to_ptr.vmem [resolvable:$true] %s62
      %s64 = sshll.u32 %s2, 4
      %s65 = int_to_ptr.hbm [resolvable:$true] %s64
      %67 = dma.vmem_to_hbm [thread:$0]  %s63, 256, %s65, [#allocation4]
    $region21: #{tpu_custom_call.1} parent=1 // pred_fallthru
      _
    // Predicated region
    $region22: #{tpu_custom_call.1} parent=1 // pred_check
      _
    $region23: #{tpu_custom_call.1} parent=1 // pred_check_branch
      %69 = sbr.rel (0) target = $region25
    $region24: #{tpu_custom_call.1} parent=1 // pred_region
      %71 = dma.done [#allocation4], 256
    $region25: #{tpu_custom_call.1} parent=1 // pred_fallthru
      _
    %72 = vsyncpa [#allocation3], 1
    %73 = vsyncpa [#allocation6], 1
    %74 = vsyncpa [#allocation4], 1

</llo_original>
